<compile_context>
chip_gen: v6e
topology: v6e:2x2x1
jax: 0.10.0
libtpu: 0.0.40
codegen_flags: <defaults>
</compile_context>

<pallas_src>
import functools

import jax
import jax.numpy as jnp
from jax.experimental import pallas as pl
from jax.experimental.pallas import tpu as pltpu

KH = KW = 3  # conv kernel size


def upsampling_kernel(x_ref, w_ref, bias_ref, o_ref):
    # x_ref   : (1, B, Cin, H, W)          raw module input (NCHW, unpadded)
    # w_ref   : (2*Cin*KH*W, W*Cout) bf16  banded conv weights (hi/lo split), BN scale folded in
    # bias_ref: (1, W*Cout)           f32  per-(w, cout) bias (BN shift), tiled over w
    # o_ref   : (B, H, W*Cout)        f32  conv+BN result, lane-dense layout
    _, B, Cin, H, W = x_ref.shape
    WC = o_ref.shape[-1]  # W * Cout

    x = x_ref[0]                                   # (B, Cin, H, W)
    zrow = jnp.zeros((B, 1, W), x.dtype)

    # Build the (B*H, Cin*KH*W) LHS entirely in vregs: for each (ci, kh) the
    # column block is x[:, ci, h + kh - 1, :] with zero rows at the H borders
    # (sublane shift via slice + concat against a zero row; W padding lives in
    # the band matrix). K ordering is (ci, kh, w) to match the band reshape.
    parts = []
    for ci in range(Cin):
        xc = x[:, ci]                              # (B, H, W)
        parts.append(jnp.concatenate([zrow, xc[:, :H - 1, :]], axis=1))  # kh = 0 -> row h-1
        parts.append(xc)                                                 # kh = 1 -> row h
        parts.append(jnp.concatenate([xc[:, 1:, :], zrow], axis=1))      # kh = 2 -> row h+1
    lhs = jnp.concatenate(parts, axis=-1).reshape(B * H, Cin * KH * W)

    # Quant (eval path): clamp to [0, 1] then round (half-to-even == torch.round_),
    # applied on the lane-dense LHS (48/128 lanes instead of 8/128).
    lhs = jnp.round(jnp.clip(lhs, 0.0, 1.0))

    # LHS entries are exactly 0/1 -> bf16 cast is lossless. Duplicate along K to
    # pair with the hi/lo-split bf16 weights: one bf16 MXU contraction that is
    # f32-exact to ~1e-5.
    lhs_b = lhs.astype(jnp.bfloat16)
    lhs2 = jnp.concatenate([lhs_b, lhs_b], axis=1)          # (B*H, 2*Cin*KH*W)

    acc = jnp.dot(lhs2, w_ref[...], preferred_element_type=jnp.float32)

    # BN shift (scale already folded into w_ref) + lane-dense (256-wide) store.
    o_ref[...] = (acc + bias_ref[...]).reshape(B, H, WC)


@functools.partial(jax.jit, static_argnames=("eps", "ratio"))
def upsampling_forward(x, conv_w, gamma, beta, running_mean, running_var,
                       eps=1e-5, ratio=1):
    """x: (1, B, Cin, H, W) float32 -> (1, B, Cout, 2H, 2W) float32."""
    # TODO(synk): only the default scale_factor=2 (ratio=1) path is implemented.
    assert ratio == 1
    _, B, Cin, H, W = x.shape
    Cout = conv_w.shape[0]

    # ---- fold BatchNorm (inference) into conv weights / bias -----------------
    inv_std = 1.0 / jnp.sqrt(running_var + eps)
    scale = gamma * inv_std                          # (Cout,)
    bias = beta - running_mean * scale               # (Cout,)

    # ---- banded ("row-Toeplitz") weight matrix --------------------------------
    # band[ci, kh, w_in, w_out*Cout + co] = conv_w[co, ci, kh, w_in - w_out + 1] * scale[co]
    # (zero when kw = w_in - w_out + 1 is outside [0, KW)), so
    #   out[b, h, w_out, co] = sum_{ci, kh, w_in} xpadH[b, ci, h + kh, w_in] * band[...]
    # which is exactly Conv2d(k=3, s=1, p=1); zero padding along W is built in.
    wt = jnp.transpose(conv_w, (1, 2, 3, 0)) * scale[None, None, None, :]  # (Cin,KH,KW,Cout)
    w_in = jnp.arange(W)[:, None]
    w_out = jnp.arange(W)[None, :]
    kw = w_in - w_out + 1                            # (W, W)
    valid = (kw >= 0) & (kw < KW)
    band = wt[:, :, jnp.clip(kw, 0, KW - 1), :]      # (Cin, KH, W, W, Cout)
    band = jnp.where(valid[None, None, :, :, None], band, 0.0)
    # Fold Cin and KH into the contraction dim -> single MXU matmul in-kernel.
    band = band.reshape(Cin * KH * W, W * Cout).astype(jnp.float32)   # (48, 256)
    # TODO(synk): for large W/Cout the O(W^2) band exceeds v7x's 64 MiB VMEM; at
    # that scale tile the band along w_out (lanes) with a grid + vmem_limit_bytes.

    # hi/lo bf16 split: band ~= hi + lo to ~2^-17 relative error; with the 0/1
    # LHS the bf16 MXU matmul then matches the f32 reference within 1e-4.
    band_hi = band.astype(jnp.bfloat16)
    band_lo = (band - band_hi.astype(jnp.float32)).astype(jnp.bfloat16)
    band2 = jnp.concatenate([band_hi, band_lo], axis=0)     # (96, 256) bf16

    bias_tiled = jnp.tile(bias, W).reshape(1, W * Cout).astype(jnp.float32)

    # Executed work: one (B*H, 2*Cin*KH*W) @ (2*Cin*KH*W, W*Cout) matmul.
    K2 = 2 * Cin * KH * W
    cost = pl.CostEstimate(
        flops=2 * (B * H) * K2 * (W * Cout),
        transcendentals=0,
        bytes_accessed=(x.size * 4 + band2.size * 2 + bias_tiled.size * 4
                        + B * H * W * Cout * 4),
    )

    # Tiny problem: single grid step, all arrays resident in VMEM.
    # TODO(synk): when H/W/Cout grow, add a grid over (B, output-row tiles) with
    # dimension_semantics=("parallel", ...) so v7x's two TensorCores are used;
    # at B=2/H=8 the extra ~0.35us/step outweighs the megacore win.
    conv_out = pl.pallas_call(
        upsampling_kernel,
        out_shape=jax.ShapeDtypeStruct((B, H, W * Cout), jnp.float32),
        in_specs=[pl.BlockSpec(memory_space=pltpu.MemorySpace.VMEM)] * 3,
        out_specs=pl.BlockSpec(memory_space=pltpu.MemorySpace.VMEM),
        cost_estimate=cost,
    )(x, band2, bias_tiled)

    # Fused epilogue (single relayout under this jit): nearest x2 upsample +
    # (w, cout)-folded layout -> NCHW, via broadcast_to + reshape (no jnp.repeat).
    y = conv_out.reshape(B, H, W, Cout)
    y = jnp.transpose(y, (0, 3, 1, 2))                                  # (B, Cout, H, W)
    y = jnp.broadcast_to(y[:, :, :, None, :, None], (B, Cout, H, 2, W, 2))
    y = y.reshape(B, Cout, 2 * H, 2 * W)
    return y[None]                                                      # unsqueeze(0)


def reference_forward(x, conv_w, gamma, beta, running_mean, running_var, eps=1e-5):
    """Pure-JAX reference mirroring the PyTorch module (eval mode)."""
    q = jnp.round(jnp.clip(x, 0.0, 1.0))
    xs = q[0]  # (B, Cin, H, W)
    y = jax.lax.conv_general_dilated(
        xs, conv_w, window_strides=(1, 1), padding=((1, 1), (1, 1)),
        dimension_numbers=("NCHW", "OIHW", "NCHW"),
        precision=jax.lax.Precision.HIGHEST)
    c = lambda v: v[None, :, None, None]
    y = (y - c(running_mean)) / jnp.sqrt(c(running_var) + eps) * c(gamma) + c(beta)
    y = jnp.repeat(jnp.repeat(y, 2, axis=2), 2, axis=3)  # nearest x2
    return y[None]


if __name__ == "__main__":
    # Small shapes consistent with the module: in_channels=2, embed_dims=32, ratio=1.
    B, Cin, H, W, Cout = 2, 2, 8, 8, 32
    key = jax.random.PRNGKey(0)
    k_x, k_w, k_g, k_b, k_m, k_v = jax.random.split(key, 6)

    x = jax.random.uniform(k_x, (1, B, Cin, H, W), jnp.float32, minval=-0.3, maxval=1.3)
    conv_w = 0.1 * jax.random.normal(k_w, (Cout, Cin, KH, KW), jnp.float32)
    gamma = jax.random.uniform(k_g, (Cout,), jnp.float32, minval=0.5, maxval=1.5)
    beta = 0.1 * jax.random.normal(k_b, (Cout,), jnp.float32)
    running_mean = 0.1 * jax.random.normal(k_m, (Cout,), jnp.float32)
    running_var = jax.random.uniform(k_v, (Cout,), jnp.float32, minval=0.5, maxval=1.5)

    out = upsampling_forward(x, conv_w, gamma, beta, running_mean, running_var)
    out = jax.block_until_ready(out)

    ref = jax.block_until_ready(
        reference_forward(x, conv_w, gamma, beta, running_mean, running_var))

    assert out.shape == (1, B, Cout, 2 * H, 2 * W), out.shape
    assert jnp.allclose(out, ref, rtol=1e-4, atol=1e-4), float(jnp.max(jnp.abs(out - ref)))
    print("KERNEL_OK")
</pallas_src>

<mosaic_0001>
module attributes {stable_mosaic.version = 11 : i64} {
  func.func @upsampling_kernel(%arg0: memref<1x2x2x8x8xf32, #tpu.memory_space<vmem>>, %arg1: memref<96x256xbf16, #tpu.memory_space<vmem>>, %arg2: memref<1x256xf32, #tpu.memory_space<vmem>>, %arg3: memref<2x8x256xf32, #tpu.memory_space<vmem>>) attributes {dimension_semantics = [], scalar_prefetch = 0 : i64, scratch_operands = 0 : i64, tpu.core_type = #tpu.core_type<tc>} {
    %c0 = arith.constant 0 : index
    %c0_0 = arith.constant 0 : index
    %c0_1 = arith.constant 0 : index
    %c0_2 = arith.constant 0 : index
    %c0_3 = arith.constant 0 : index
    %0 = vector.load %arg0[%c0, %c0_0, %c0_1, %c0_2, %c0_3] : memref<1x2x2x8x8xf32, #tpu.memory_space<vmem>>, vector<1x2x2x8x8xf32>
    %1 = vector.shape_cast %0 : vector<1x2x2x8x8xf32> to vector<2x2x8x8xf32>
    %cst = arith.constant 0.000000e+00 : f32
    %2 = vector.broadcast %cst : f32 to vector<2x1x8xf32>
    %3 = vector.extract_strided_slice %1 {offsets = [0, 0, 0, 0], sizes = [2, 1, 8, 8], strides = [1, 1, 1, 1]} : vector<2x2x8x8xf32> to vector<2x1x8x8xf32>
    %4 = vector.shape_cast %3 : vector<2x1x8x8xf32> to vector<2x8x8xf32>
    %5 = vector.extract_strided_slice %4 {offsets = [0, 0, 0], sizes = [2, 7, 8], strides = [1, 1, 1]} : vector<2x8x8xf32> to vector<2x7x8xf32>
    %6 = tpu.concatenate %2, %5 in 1 : vector<2x1x8xf32>, vector<2x7x8xf32> -> vector<2x8x8xf32>
    %7 = vector.extract_strided_slice %4 {offsets = [0, 1, 0], sizes = [2, 7, 8], strides = [1, 1, 1]} : vector<2x8x8xf32> to vector<2x7x8xf32>
    %8 = tpu.concatenate %7, %2 in 1 : vector<2x7x8xf32>, vector<2x1x8xf32> -> vector<2x8x8xf32>
    %9 = vector.extract_strided_slice %1 {offsets = [0, 1, 0, 0], sizes = [2, 1, 8, 8], strides = [1, 1, 1, 1]} : vector<2x2x8x8xf32> to vector<2x1x8x8xf32>
    %10 = vector.shape_cast %9 : vector<2x1x8x8xf32> to vector<2x8x8xf32>
    %11 = vector.extract_strided_slice %10 {offsets = [0, 0, 0], sizes = [2, 7, 8], strides = [1, 1, 1]} : vector<2x8x8xf32> to vector<2x7x8xf32>
    %12 = tpu.concatenate %2, %11 in 1 : vector<2x1x8xf32>, vector<2x7x8xf32> -> vector<2x8x8xf32>
    %13 = vector.extract_strided_slice %10 {offsets = [0, 1, 0], sizes = [2, 7, 8], strides = [1, 1, 1]} : vector<2x8x8xf32> to vector<2x7x8xf32>
    %14 = tpu.concatenate %13, %2 in 1 : vector<2x7x8xf32>, vector<2x1x8xf32> -> vector<2x8x8xf32>
    %15 = tpu.concatenate %6, %4, %8, %12, %10, %14 in 2 : vector<2x8x8xf32>, vector<2x8x8xf32>, vector<2x8x8xf32>, vector<2x8x8xf32>, vector<2x8x8xf32>, vector<2x8x8xf32> -> vector<2x8x48xf32>
    %16 = vector.shape_cast %15 : vector<2x8x48xf32> to vector<16x48xf32>
    %cst_4 = arith.constant 0.000000e+00 : f32
    %cst_5 = arith.constant 1.000000e+00 : f32
    %17 = vector.broadcast %cst_4 : f32 to vector<16x48xf32>
    %18 = arith.maximumf %17, %16 : vector<16x48xf32>
    %19 = vector.broadcast %cst_5 : f32 to vector<16x48xf32>
    %20 = arith.minimumf %19, %18 : vector<16x48xf32>
    %21 = math.roundeven %20 : vector<16x48xf32>
    %22 = arith.truncf %21 : vector<16x48xf32> to vector<16x48xbf16>
    %23 = tpu.concatenate %22, %22 in 1 : vector<16x48xbf16>, vector<16x48xbf16> -> vector<16x96xbf16>
    %c0_6 = arith.constant 0 : index
    %c0_7 = arith.constant 0 : index
    %24 = vector.load %arg1[%c0_6, %c0_7] : memref<96x256xbf16, #tpu.memory_space<vmem>>, vector<96x256xbf16>
    %cst_8 = arith.constant dense<0.000000e+00> : vector<16x256xf32>
    %25 = tpu.matmul %23, %24, %cst_8 {dimension_numbers = #tpu.dot_dimension_numbers<[1], [0], [0], [1], [0, 0, 1, 1], [], []>} : vector<16x96xbf16>, vector<96x256xbf16>, vector<16x256xf32> -> vector<16x256xf32>
    %c0_9 = arith.constant 0 : index
    %c0_10 = arith.constant 0 : index
    %26 = vector.load %arg2[%c0_9, %c0_10] : memref<1x256xf32, #tpu.memory_space<vmem>>, vector<1x256xf32>
    %27 = vector.broadcast %26 : vector<1x256xf32> to vector<16x256xf32>
    %28 = arith.addf %25, %27 : vector<16x256xf32>
    %29 = vector.shape_cast %28 : vector<16x256xf32> to vector<2x8x256xf32>
    %c0_11 = arith.constant 0 : index
    %c0_12 = arith.constant 0 : index
    %c0_13 = arith.constant 0 : index
    %30 = vector.load %arg3[%c0_11, %c0_12, %c0_13] : memref<2x8x256xf32, #tpu.memory_space<vmem>>, vector<2x8x256xf32>
    tpu.vector_store %arg3[%c0_11, %c0_12, %c0_13], %29 {strides = array<i32>} : memref<2x8x256xf32, #tpu.memory_space<vmem>>, vector<2x8x256xf32>,
    return
  }
}

</mosaic_0001>

<llo_original>
// kernel: tile.8
$region0: #{tile.8}
  #allocation0 [shape = 's32[1]{0}', space=sflag, size = 0x4, scoped, tag = 'scoped memory for tile.8']
  %s0 = inlined_call_operand.vmem [shape: f32[32], index: 0, kind: input, shape index: {}]
  %s1 = inlined_call_operand.vmem [shape: f32[8,32], index: 1, kind: output, shape index: {}]
  // Predicated region
  $region2: #{tile.8} parent=0 // pred_check
    _
  $region3: #{tile.8} parent=0 // pred_check_branch
    %3 = sbr.rel (0) target = $region5
  $region4: #{tile.8} parent=0 // pred_region
    _
  $region5: #{tile.8} parent=0 // pred_fallthru
    _
  %v4 = vld [vmem:[%s0] ss:$0 sm:$0xff]
  %5 = vst [vmem:[%s1] sm:$0xff] %v4

// kernel: tile.9
$region0: #{tile.9}
  %s0 = inlined_call_operand.vmem [shape: f32[8,32], index: 0, kind: input, shape index: {}]
  %s1 = inlined_call_operand.vmem [shape: f32[1,256], index: 1, kind: output, shape index: {}]
  $region1: #{tile.9} parent=0
    #allocation0 [shape = 'u8[8192]{0}', space=vmem, size = 0x2000, scoped, tag = 'scoped mem for output reshape']
    %s2 = smov 3
    %v3 = vld [vmem:[%s0] ss:$4 sm:%s2]
    %vm4 = vcmask 261120
    %5 = vst.msk [vmem:[#allocation0] ss:$8 sm:$0x3] %vm4, %v3
    %s6 = scalar_lea.vmem %s0, 3
    %s7 = smov 3
    %v8 = vld [vmem:[%s6] ss:$4 sm:%s7]
    %9 = vrot.lane.b32.xlu0 %v8, 96
    %v10 = vpop.permute.xlu0 %9
    %vm11 = vcmask 1048320
    %12 = vst.msk [vmem:[#allocation0] ss:$8 sm:$0x3] %vm11, %v10
    %s13 = scalar_lea.vmem %s0, 2
    %s14 = smov 3
    %v15 = vld [vmem:[%s13] ss:$4 sm:%s14]
    %16 = vrot.lane.b32.xlu0 %v15, 64
    %v17 = vpop.permute.xlu0 %16
    %vm18 = vcmask 785920
    %19 = vst.msk [vmem:[#allocation0] ss:$8 sm:$0x3] %vm18, %v17
    %s20 = scalar_lea.vmem %s0, 1
    %s21 = smov 3
    %v22 = vld [vmem:[%s20] ss:$4 sm:%s21]
    %23 = vrot.lane.b32.xlu0 %v22, 32
    %v24 = vpop.permute.xlu0 %23
    %vm25 = vcmask 523520
    %26 = vst.msk [vmem:[#allocation0] ss:$8 sm:$0x3] %vm25, %v24
    %s28 = sshll.u32 1, 1
    %s29 = ssub.s32 %s28, 1
    %v31 = vld [vmem:[#allocation0] sm:%s29]
    %s32 = sshll.u32 1, 1
    %s33 = ssub.s32 %s32, 1
    %34 = vst [vmem:[%s1] sm:%s33] %v31
    %s35 = scalar_lea.vmem [#allocation0], 8
    %v36 = vld [vmem:[%s35] sm:%s29]
    %s37 = sshll.u32 1, 1
    %s38 = ssub.s32 %s37, 1
    %s39 = scalar_lea.vmem %s1, 1
    %40 = vst [vmem:[%s39] sm:%s38] %v36

// kernel: upsampling_forward.1
$region0: #{upsampling_forward.1}
  #allocation0 [shape = 'u32[]', space=smem, size = 0x4, offset = 0x4, fixed_abs, tag = 'smem constant byte address 0x4 - core index']
  #allocation1 [shape = 'u32[144,128]{1,0:T(1,128)}', space=vmem, size = 0x12000, scoped, tag = 'internal scratch']
  %s0 = inlined_call_operand.vmem [shape: f32[1,2,2,8,8], index: 0, kind: input, shape index: {}]
  %s1 = inlined_call_operand.vmem [shape: bf16[96,256], index: 1, kind: input, shape index: {}]
  %s2 = inlined_call_operand.vmem [shape: f32[1,256], index: 2, kind: input, shape index: {}]
  %s3 = inlined_call_operand.vmem [shape: f32[2,8,256], index: 3, kind: output, shape index: {}]
  %s4 = sld [smem:[#allocation0]]
  $region22: #{upsampling_forward.1} parent=0
    _
  %s6 = ssub.s32 1, %s4
  %s7 = scalar_select 0, %s6, %s4
  // Predicated region
  $region2: #{upsampling_forward.1} parent=0 // pred_check
    _
  $region3: #{upsampling_forward.1} parent=0 // pred_check_branch
    %9 = sbr.rel (0) target = $region5
  $region4: #{upsampling_forward.1} parent=0 // pred_region
    _
  $region5: #{upsampling_forward.1} parent=0 // pred_fallthru
    _
  // Predicated region
  $region6: #{upsampling_forward.1} parent=0 // pred_check
    _
  $region7: #{upsampling_forward.1} parent=0 // pred_check_branch
    %11 = sbr.rel (0) target = $region9
  $region8: #{upsampling_forward.1} parent=0 // pred_region
    _
  $region9: #{upsampling_forward.1} parent=0 // pred_fallthru
    _
  // Predicated region
  $region10: #{upsampling_forward.1} parent=0 // pred_check
    _
  $region11: #{upsampling_forward.1} parent=0 // pred_check_branch
    %13 = sbr.rel (0) target = $region13
  $region12: #{upsampling_forward.1} parent=0 // pred_region
    _
  $region13: #{upsampling_forward.1} parent=0 // pred_fallthru
    _
  %v15 = vld [vmem:[%s0] sm:$0xff]
  %v16 = vld [vmem:[%s0 + $0x8] sm:$0xff]
  %v17 = vld [vmem:[%s0 + $0x10] sm:$0xff]
  %v18 = vld [vmem:[%s0 + $0x18] sm:$0xff]
  %v21 = vrot.slane %v15, 7
  %v22 = vrot.slane %v17, 7
  %vm25 = vcmask 1040384
  %v26 = vsel %vm25, 0.0, %v21
  %v27 = vsel %vm25, 0.0, %v22
  %v28 = vrot.slane %v15, 1
  %v29 = vrot.slane %v17, 1
  %vm32 = vcmask 1046528
  %v33 = vsel %vm32, %v28, 0.0
  %v34 = vsel %vm32, %v29, 0.0
  %v37 = vrot.slane %v16, 7
  %v38 = vrot.slane %v18, 7
  %v41 = vsel %vm25, 0.0, %v37
  %v42 = vsel %vm25, 0.0, %v38
  %v43 = vrot.slane %v16, 1
  %v44 = vrot.slane %v18, 1
  %v47 = vsel %vm32, %v43, 0.0
  %v48 = vsel %vm32, %v44, 0.0
  %49 = vrot.lane.b32.xlu0 %v15, 8
  %v50 = vpop.permute.xlu0 %49
  %51 = vrot.lane.b32.xlu0 %v17, 8
  %v52 = vpop.permute.xlu0 %51
  %57 = vrot.lane.b32.xlu0 %v33, 16
  %v58 = vpop.permute.xlu0 %57
  %59 = vrot.lane.b32.xlu0 %v34, 16
  %v60 = vpop.permute.xlu0 %59
  %65 = vrot.lane.b32.xlu0 %v41, 24
  %v66 = vpop.permute.xlu0 %65
  %67 = vrot.lane.b32.xlu0 %v42, 24
  %v68 = vpop.permute.xlu0 %67
  %71 = vrot.lane.b32.xlu0 %v16, 32
  %v72 = vpop.permute.xlu0 %71
  %73 = vrot.lane.b32.xlu0 %v18, 32
  %v74 = vpop.permute.xlu0 %73
  %79 = vrot.lane.b32.xlu0 %v47, 40
  %v80 = vpop.permute.xlu0 %79
  %81 = vrot.lane.b32.xlu0 %v48, 40
  %v82 = vpop.permute.xlu0 %81
  %vm85 = vcmask 64512
  %v86 = vsel %vm85, %v26, %v50
  %v87 = vsel %vm85, %v27, %v52
  %vm88 = vcmask 130048
  %v89 = vsel %vm88, %v86, %v58
  %v90 = vsel %vm88, %v87, %v60
  %vm91 = vcmask 195584
  %v92 = vsel %vm91, %v89, %v66
  %v93 = vsel %vm91, %v90, %v68
  %vm94 = vcmask 261120
  %v95 = vsel %vm94, %v92, %v72
  %v96 = vsel %vm94, %v93, %v74
  %vm97 = vcmask 326656
  %v98 = vsel %vm97, %v95, %v80
  %v99 = vsel %vm97, %v96, %v82
  %v100 = vmax.f32 %v98, 0.0
  %v101 = vmax.f32 %v99, 0.0
  %v102 = vmin.f32 %v100, 1.0
  %v103 = vmin.f32 %v101, 1.0
  %v104 = vround.ne.pseudo %v102
  %v105 = vround.ne.pseudo %v103
  %v106 = vpack.c.bf16 %v105, %v104
  %108 = vrot.lane.b32.xlu0 %v106, 48
  %v109 = vpop.permute.xlu0 %108
  %vm110 = vcmask 392192
  %v113 = vsel %vm110, %v106, %v109
  %v114 = vld [vmem:[%s1] sm:$0xff]
  %v115 = vld [vmem:[%s1 + $0x8] sm:$0xff]
  %v116 = vld [vmem:[%s1 + $0x10] sm:$0xff]
  %v117 = vld [vmem:[%s1 + $0x18] sm:$0xff]
  %v118 = vld [vmem:[%s1 + $0x20] sm:$0xff]
  %v119 = vld [vmem:[%s1 + $0x28] sm:$0xff]
  %v120 = vld [vmem:[%s1 + $0x30] sm:$0xff]
  %v121 = vld [vmem:[%s1 + $0x38] sm:$0xff]
  %v122 = vld [vmem:[%s1 + $0x40] sm:$0xff]
  %v123 = vld [vmem:[%s1 + $0x48] sm:$0xff]
  %v124 = vld [vmem:[%s1 + $0x50] sm:$0xff]
  %v125 = vld [vmem:[%s1 + $0x58] sm:$0xff]
  %v126 = vld [vmem:[%s2] sm:$0x3]
  %v128 = vlaneseq
  %v129 = vshrl.u32 %v128, 7
  %v130 = vsub.s32 0, %v129
  %v131 = vrot.slane %v126, %v130
  %v132 = vlaneseq
  %v133 = vshrl.u32 %v132, 7
  %v134 = vsub.s32 1, %v133
  %v135 = vrot.slane %v126, %v134
  %v150 = vunpack.c.l.b16 %v114
  %v151 = vunpack.c.h.b16 %v114
  %v152 = vunpack.c.l.b16 %v115
  %v153 = vunpack.c.h.b16 %v115
  %v154 = vunpack.c.l.b16 %v116
  %v155 = vunpack.c.h.b16 %v116
  %v156 = vunpack.c.l.b16 %v117
  %v157 = vunpack.c.h.b16 %v117
  %v158 = vunpack.c.l.b16 %v118
  %v159 = vunpack.c.h.b16 %v118
  %v160 = vunpack.c.l.b16 %v119
  %v161 = vunpack.c.h.b16 %v119
  %v162 = vunpack.c.l.b16 %v120
  %v163 = vunpack.c.h.b16 %v120
  %v164 = vunpack.c.l.b16 %v121
  %v165 = vunpack.c.h.b16 %v121
  %v166 = vunpack.c.l.b16 %v122
  %v167 = vunpack.c.h.b16 %v122
  %v168 = vunpack.c.l.b16 %v123
  %v169 = vunpack.c.h.b16 %v123
  %v170 = vunpack.c.l.b16 %v124
  %v171 = vunpack.c.h.b16 %v124
  %v172 = vunpack.c.l.b16 %v125
  %v173 = vunpack.c.h.b16 %v125
  %v174 = vpack.c.b16 %v152, %v150
  %v175 = vpack.c.b16 %v153, %v151
  %v176 = vpack.c.b16 %v156, %v154
  %v177 = vpack.c.b16 %v157, %v155
  %v178 = vpack.c.b16 %v160, %v158
  %v179 = vpack.c.b16 %v161, %v159
  %v180 = vpack.c.b16 %v164, %v162
  %v181 = vpack.c.b16 %v165, %v163
  %v182 = vpack.c.b16 %v168, %v166
  %v183 = vpack.c.b16 %v169, %v167
  %v184 = vpack.c.b16 %v172, %v170
  %v185 = vpack.c.b16 %v173, %v171
  %vm198 = vcmask 785408
  %v199 = vsel %vm198, %v113, 0
  %201 = vmatprep.subr.bf16.mxu0 0
  %202 = vmatpush1.bf16.msra.mxu0 0
  %203 = vmatprep.subr.bf16.mxu0 0
  %204 = vmatpush1.bf16.msra.mxu0 0
  %205 = vmatprep.subr.bf16.mxu0 %v185
  %206 = vmatpush1.bf16.msra.mxu0 %v184
  %207 = vmatprep.subr.bf16.mxu0 %v183
  %208 = vmatpush1.bf16.msra.mxu0 %v182
  %209 = vmatprep.subr.bf16.mxu0 %v181
  %210 = vmatpush1.bf16.msra.mxu0 %v180
  %211 = vmatprep.subr.bf16.mxu0 %v179
  %212 = vmatpush1.bf16.msra.mxu0 %v178
  %213 = vmatprep.subr.bf16.mxu0 %v177
  %214 = vmatpush1.bf16.msra.mxu0 %v176
  %215 = vmatprep.subr.bf16.mxu0 %v175
  %216 = vmatpush1.bf16.msra.mxu0 %v174
  %217 = vmatprep.subr.bf16.mxu0 0
  %218 = vmatpush2.bf16.msra.mxu0 0
  %219 = vmatprep.subr.bf16.mxu0 0
  %220 = vmatpush2.bf16.msra.mxu0 0
  %221 = vmatprep.subr.bf16.mxu0 0
  %222 = vmatpush2.bf16.msra.mxu0 0
  %223 = vmatprep.subr.bf16.mxu0 0
  %224 = vmatpush2.bf16.msra.mxu0 0
  %225 = vmatprep.subr.bf16.mxu0 0
  %226 = vmatpush2.bf16.msra.mxu0 0
  %227 = vmatprep.subr.bf16.mxu0 0
  %228 = vmatpush2.bf16.msra.mxu0 0
  %229 = vmatprep.subr.bf16.mxu0 0
  %230 = vmatpush2.bf16.msra.mxu0 0
  %231 = vmatprep.subr.bf16.mxu0 0
  %232 = vmatpush2.bf16.msra.mxu0 0
  %233 = vmatprep.mubr.bf16.mxu0 0
  %234 = vmatmul.mubr.bf16.gmra.mxu0 %v199
  %v235 = vpop.f32.mrf.mxu0
  %v236 = vadd.f32 %v131, %v235
  %v237 = vpop.f32.mrf.mxu0
  %v238 = vadd.f32 %v135, %v237
  %v239 = vpop.f32.mrf.mxu0
  %v240 = vadd.f32 %v131, %v239
  %v241 = vpop.f32.mrf.mxu0
  %v242 = vadd.f32 %v135, %v241
  %243 = vdwg.mxu0
  %244 = vst [vmem:[%s3] sm:$0xff] %v236
  %245 = vst [vmem:[%s3 + $0x8] sm:$0xff] %v238
  %246 = vst [vmem:[%s3 + $0x10] sm:$0xff] %v240
  %247 = vst [vmem:[%s3 + $0x18] sm:$0xff] %v242
  // Predicated region
  $region14: #{upsampling_forward.1} parent=0 // pred_check
    _
  $region15: #{upsampling_forward.1} parent=0 // pred_check_branch
    %249 = sbr.rel (0) target = $region17
  $region16: #{upsampling_forward.1} parent=0 // pred_region
    _
  $region17: #{upsampling_forward.1} parent=0 // pred_fallthru
    _
  // Predicated region
  $region18: #{upsampling_forward.1} parent=0 // pred_check
    _
  $region19: #{upsampling_forward.1} parent=0 // pred_check_branch
    %251 = sbr.rel (0) target = $region21
  $region20: #{upsampling_forward.1} parent=0 // pred_region
    _
  $region21: #{upsampling_forward.1} parent=0 // pred_fallthru
    _

</llo_original>
